<compile_context>
chip_gen: v6e
topology: v6e:2x2x1
jax: 0.10.0
libtpu: 0.0.40
codegen_flags: <defaults>
</compile_context>

<pallas_src>
from functools import partial

import numpy as np
import jax
import jax.numpy as jnp
from jax.experimental import pallas as pl
from jax.experimental.pallas import tpu as pltpu


def _round_up(v, m):
    return ((v + m - 1) // m) * m


def _pick_tile(L, B, tile_l):
    """Tile size along length. Prefers (a) no length padding, (b) >=2 grid steps."""
    tile_l = max(8, int(tile_l))
    if L <= tile_l:
        if B >= 2 or L < 16:
            return L, 1                          # exact single tile, no padding
        TL = _round_up(-(-L // 2), 8)            # B == 1: keep the 2nd core busy
        return TL, -(-L // TL)
    base = _round_up(tile_l, 8)
    # prefer a nearby multiple of 8 that divides L (kills the output [:, :L] copy)
    for cand in range(base, max(8, base // 2) - 1, -8):
        if L % cand == 0:
            return cand, L // cand
    return base, -(-L // base)


@partial(jax.jit, static_argnames=("tile_l", "compute_dtype"))
def upsample1d(x, weight, bias, *, tile_l=512, compute_dtype=None):
    """x: (B, C, L); weight: (C, C, 4) [in, out, k]; bias: (C,).
    Returns (B, C, 2L), matching nn.ConvTranspose1d(dim, dim, 4, 2, 1)."""
    B, C, L = x.shape
    cdt = jnp.dtype(compute_dtype) if compute_dtype is not None else x.dtype
    out_dtype = x.dtype

    TL, n_lt = _pick_tile(L, B, tile_l)
    L_pad = TL * n_lt
    C_p = 128 if C < 128 else C                   # lane-dense blocks for small C

    # ---- glue: NCL -> NLC, pad channels/length with zeros in one op -------
    xt = jnp.transpose(x, (0, 2, 1)).astype(cdt)                    # (B, L, C)
    xt_pad = jnp.pad(xt, ((0, 0), (0, L_pad - L), (0, C_p - C)))    # no-op if exact

    # ---- tiny per-tile halo rows: [x[t*TL - 1], x[(t+1)*TL]] ---------------
    zrow = jnp.zeros((B, 1, C_p), cdt)
    if n_lt > 1:
        prev_rows = xt_pad[:, TL - 1 :: TL, :][:, : n_lt - 1, :]    # (B, n_lt-1, C_p)
        next_rows = xt_pad[:, TL :: TL, :]                          # (B, n_lt-1, C_p)
        prev = jnp.concatenate([zrow, prev_rows], axis=1)
        nxt = jnp.concatenate([next_rows, zrow], axis=1)
    else:
        prev, nxt = zrow, zrow
    halo = jnp.stack([prev, nxt], axis=2)                           # (B, n_lt, 2, C_p)

    # ---- weights: (4, Cin, Cout) taps; bias stays f32 ----------------------
    w_all = jnp.transpose(weight, (2, 0, 1)).astype(cdt)            # (4, C, C)
    w_all = jnp.pad(w_all, ((0, 0), (0, C_p - C), (0, C_p - C)))    # (4, C_p, C_p)
    b2 = jnp.pad(bias.astype(jnp.float32), (0, C_p - C)).reshape(1, C_p)

    # ---- Pallas kernel ------------------------------------------------------
    def kernel(x_ref, h_ref, w_ref, b_ref, o_ref):
        x_cur = x_ref[0]                                    # (TL, Cp)
        halo_rows = h_ref[0, 0]                             # (2, Cp): [prev, next]
        # one-row-shifted views built in VMEM (C-wide temporaries only)
        x_prev = jnp.concatenate([halo_rows[0:1, :], x_cur[:-1, :]], axis=0)
        x_next = jnp.concatenate([x_cur[1:, :], halo_rows[1:2, :]], axis=0)
        b = b_ref[...]                                      # (1, Cp) f32
        y_even = (jnp.dot(x_cur, w_ref[1], preferred_element_type=jnp.float32)
                  + jnp.dot(x_prev, w_ref[3], preferred_element_type=jnp.float32)
                  + b)
        y_odd = (jnp.dot(x_cur, w_ref[2], preferred_element_type=jnp.float32)
                 + jnp.dot(x_next, w_ref[0], preferred_element_type=jnp.float32)
                 + b)
        # write interleave-ready [even | odd] lane halves directly
        o_ref[0, :, 0:C_p] = y_even.astype(o_ref.dtype)
        o_ref[0, :, C_p:2 * C_p] = y_odd.astype(o_ref.dtype)

    # ---- VMEM budget from actual per-step footprint ------------------------
    isz = jnp.dtype(cdt).itemsize
    osz = jnp.dtype(out_dtype).itemsize
    x_blk = TL * C_p * isz
    h_blk = 2 * C_p * isz
    o_blk = TL * 2 * C_p * osz
    w_res = 4 * C_p * C_p * isz + C_p * 4
    temps = 2 * TL * C_p * isz + 2 * TL * C_p * 4     # x_prev/x_next + f32 halves
    vmem_bytes = 2 * (x_blk + h_blk + o_blk + w_res) + temps
    vmem_limit = int(min(100 * 2**20, max(32 * 2**20, 2 * vmem_bytes)))

    out = pl.pallas_call(
        kernel,
        out_shape=jax.ShapeDtypeStruct((B, L_pad, 2 * C_p), out_dtype),
        grid=(B, n_lt),
        in_specs=[
            pl.BlockSpec((1, TL, C_p), lambda b, t: (b, t, 0)),        # x tile
            pl.BlockSpec((1, 1, 2, C_p), lambda b, t: (b, t, 0, 0)),   # halo rows
            pl.BlockSpec((4, C_p, C_p), lambda b, t: (0, 0, 0)),       # resident W
            pl.BlockSpec((1, C_p), lambda b, t: (0, 0)),               # resident b
        ],
        out_specs=pl.BlockSpec((1, TL, 2 * C_p), lambda b, t: (b, t, 0)),
        compiler_params=pltpu.CompilerParams(
            dimension_semantics=("parallel", "parallel"),
            vmem_limit_bytes=vmem_limit),
    )(xt_pad, halo, w_all, b2)

    # ---- glue: drop padding (no-op when exact), interleave, NLC -> NCL ------
    y = out.reshape(B, L_pad, 2, C_p)[:, :L, :, :C]      # (B, L, 2, C)
    y = y.reshape(B, 2 * L, C)                           # (B, 2L, C) interleaved
    return jnp.transpose(y, (0, 2, 1))                   # (B, C, 2L)


def ref_conv_transpose1d(x, weight, bias):
    """NumPy reference for nn.ConvTranspose1d(dim, dim, 4, 2, 1)."""
    x = np.asarray(x, dtype=np.float64)
    w = np.asarray(weight, dtype=np.float64)   # (Cin, Cout, K)
    b = np.asarray(bias, dtype=np.float64)
    B, C, L = x.shape
    K, stride, pad = w.shape[2], 2, 1
    full = np.zeros((B, C, (L - 1) * stride + K), dtype=np.float64)
    for l in range(L):
        for k in range(K):
            full[:, :, l * stride + k] += np.einsum("bi,io->bo", x[:, :, l], w[:, :, k])
    out = full[:, :, pad:pad + 2 * L] + b[None, :, None]
    return out


if __name__ == "__main__":
    def make_case(key, B, C, L):
        kx, kw, kb = jax.random.split(key, 3)
        fan_in = C * 4
        bound = 1.0 / np.sqrt(fan_in)
        weight = jax.random.uniform(kw, (C, C, 4), jnp.float32, -bound, bound)
        bias = jax.random.uniform(kb, (C,), jnp.float32, -bound, bound)
        x = jax.random.normal(kx, (B, C, L), jnp.float32)
        return x, weight, bias

    k1, k2, k3 = jax.random.split(jax.random.PRNGKey(0), 3)

    # Case 1: small module-consistent shapes; exercises the channel-pad (C<128)
    # and exact single-tile (TL == L, no length padding) paths.
    x, w, b = make_case(k1, 2, 4, 16)
    y = jax.block_until_ready(upsample1d(x, w, b))
    assert y.shape == (2, 4, 2 * 16), y.shape
    np.testing.assert_allclose(np.asarray(y), ref_conv_transpose1d(x, w, b),
                               rtol=1e-5, atol=1e-5)

    # Case 2: exercises the tiled path — 128-wide lanes, L not a multiple of
    # the tile (length padding + output slice), multiple pipelined grid steps.
    x, w, b = make_case(k2, 2, 128, 37)
    y = jax.block_until_ready(upsample1d(x, w, b, tile_l=16))
    assert y.shape == (2, 128, 2 * 37), y.shape
    np.testing.assert_allclose(np.asarray(y), ref_conv_transpose1d(x, w, b),
                               rtol=1e-4, atol=1e-4)

    # Case 3: B == 1 occupancy split (length cut into >=2 parallel tiles).
    x, w, b = make_case(k3, 1, 128, 64)
    y = jax.block_until_ready(upsample1d(x, w, b))
    assert y.shape == (1, 128, 2 * 64), y.shape
    np.testing.assert_allclose(np.asarray(y), ref_conv_transpose1d(x, w, b),
                               rtol=1e-4, atol=1e-4)

    # Case 4: optional bf16 compute path (f32 accumulation / bias add).
    x, w, b = make_case(k2, 2, 128, 37)
    y = jax.block_until_ready(upsample1d(x, w, b, tile_l=16,
                                         compute_dtype=jnp.bfloat16))
    assert y.shape == (2, 128, 2 * 37), y.shape
    np.testing.assert_allclose(np.asarray(y), ref_conv_transpose1d(x, w, b),
                               rtol=5e-2, atol=5e-2)

    print("KERNEL_OK")
</pallas_src>

<mosaic_0001>
module attributes {stable_mosaic.version = 11 : i64} {
  func.func @kernel(%arg0: i32, %arg1: i32, %arg2: memref<1x16x128xf32, #tpu.memory_space<vmem>>, %arg3: memref<1x1x2x128xf32, #tpu.memory_space<vmem>>, %arg4: memref<4x128x128xf32, #tpu.memory_space<vmem>>, %arg5: memref<1x128xf32, #tpu.memory_space<vmem>>, %arg6: memref<1x16x256xf32, #tpu.memory_space<vmem>>) attributes {dimension_semantics = [#tpu.dimension_semantics<parallel>, #tpu.dimension_semantics<parallel>], iteration_bounds = array<i64: 2, 1>, scalar_prefetch = 0 : i64, scratch_operands = 0 : i64, tpu.core_type = #tpu.core_type<tc>, window_params = [{transform_indices = @transform_0, window_bounds = array<i64: 1, 16, 128>}, {transform_indices = @transform_1, window_bounds = array<i64: 1, 1, 2, 128>}, {pipeline_mode = #tpu.pipeline_mode<synchronous>, transform_indices = @transform_2, window_bounds = array<i64: 4, 128, 128>}, {pipeline_mode = #tpu.pipeline_mode<synchronous>, transform_indices = @transform_3, window_bounds = array<i64: 1, 128>}, {transform_indices = @transform_4, window_bounds = array<i64: 1, 16, 256>}]} {
    %c0 = arith.constant 0 : index
    %c0_0 = arith.constant 0 : index
    %c0_1 = arith.constant 0 : index
    %0 = vector.load %arg2[%c0, %c0_0, %c0_1] : memref<1x16x128xf32, #tpu.memory_space<vmem>>, vector<1x16x128xf32>
    %1 = vector.shape_cast %0 : vector<1x16x128xf32> to vector<16x128xf32>
    %c0_2 = arith.constant 0 : index
    %c0_3 = arith.constant 0 : index
    %c0_4 = arith.constant 0 : index
    %c0_5 = arith.constant 0 : index
    %2 = vector.load %arg3[%c0_2, %c0_3, %c0_4, %c0_5] : memref<1x1x2x128xf32, #tpu.memory_space<vmem>>, vector<1x1x2x128xf32>
    %3 = vector.shape_cast %2 : vector<1x1x2x128xf32> to vector<2x128xf32>
    %4 = vector.extract_strided_slice %3 {offsets = [0, 0], sizes = [1, 128], strides = [1, 1]} : vector<2x128xf32> to vector<1x128xf32>
    %5 = vector.extract_strided_slice %1 {offsets = [0, 0], sizes = [15, 128], strides = [1, 1]} : vector<16x128xf32> to vector<15x128xf32>
    %6 = tpu.concatenate %4, %5 in 0 : vector<1x128xf32>, vector<15x128xf32> -> vector<16x128xf32>
    %7 = vector.extract_strided_slice %1 {offsets = [1, 0], sizes = [15, 128], strides = [1, 1]} : vector<16x128xf32> to vector<15x128xf32>
    %8 = vector.extract_strided_slice %3 {offsets = [1, 0], sizes = [1, 128], strides = [1, 1]} : vector<2x128xf32> to vector<1x128xf32>
    %9 = tpu.concatenate %7, %8 in 0 : vector<15x128xf32>, vector<1x128xf32> -> vector<16x128xf32>
    %c0_6 = arith.constant 0 : index
    %c0_7 = arith.constant 0 : index
    %10 = vector.load %arg5[%c0_6, %c0_7] : memref<1x128xf32, #tpu.memory_space<vmem>>, vector<1x128xf32>
    %c1 = arith.constant 1 : index
    %c0_8 = arith.constant 0 : index
    %c0_9 = arith.constant 0 : index
    %11 = vector.load %arg4[%c1, %c0_8, %c0_9] : memref<4x128x128xf32, #tpu.memory_space<vmem>>, vector<1x128x128xf32>
    %12 = vector.shape_cast %11 : vector<1x128x128xf32> to vector<128x128xf32>
    %cst = arith.constant dense<0.000000e+00> : vector<16x128xf32>
    %13 = tpu.matmul %1, %12, %cst {dimension_numbers = #tpu.dot_dimension_numbers<[1], [0], [0], [1], [0, 0, 1, 1], [], []>} : vector<16x128xf32>, vector<128x128xf32>, vector<16x128xf32> -> vector<16x128xf32>
    %c3 = arith.constant 3 : index
    %c0_10 = arith.constant 0 : index
    %c0_11 = arith.constant 0 : index
    %14 = vector.load %arg4[%c3, %c0_10, %c0_11] : memref<4x128x128xf32, #tpu.memory_space<vmem>>, vector<1x128x128xf32>
    %15 = vector.shape_cast %14 : vector<1x128x128xf32> to vector<128x128xf32>
    %cst_12 = arith.constant dense<0.000000e+00> : vector<16x128xf32>
    %16 = tpu.matmul %6, %15, %cst_12 {dimension_numbers = #tpu.dot_dimension_numbers<[1], [0], [0], [1], [0, 0, 1, 1], [], []>} : vector<16x128xf32>, vector<128x128xf32>, vector<16x128xf32> -> vector<16x128xf32>
    %17 = arith.addf %13, %16 : vector<16x128xf32>
    %18 = vector.broadcast %10 : vector<1x128xf32> to vector<16x128xf32>
    %19 = arith.addf %17, %18 : vector<16x128xf32>
    %c2 = arith.constant 2 : index
    %c0_13 = arith.constant 0 : index
    %c0_14 = arith.constant 0 : index
    %20 = vector.load %arg4[%c2, %c0_13, %c0_14] : memref<4x128x128xf32, #tpu.memory_space<vmem>>, vector<1x128x128xf32>
    %21 = vector.shape_cast %20 : vector<1x128x128xf32> to vector<128x128xf32>
    %cst_15 = arith.constant dense<0.000000e+00> : vector<16x128xf32>
    %22 = tpu.matmul %1, %21, %cst_15 {dimension_numbers = #tpu.dot_dimension_numbers<[1], [0], [0], [1], [0, 0, 1, 1], [], []>} : vector<16x128xf32>, vector<128x128xf32>, vector<16x128xf32> -> vector<16x128xf32>
    %c0_16 = arith.constant 0 : index
    %c0_17 = arith.constant 0 : index
    %c0_18 = arith.constant 0 : index
    %23 = vector.load %arg4[%c0_16, %c0_17, %c0_18] : memref<4x128x128xf32, #tpu.memory_space<vmem>>, vector<1x128x128xf32>
    %24 = vector.shape_cast %23 : vector<1x128x128xf32> to vector<128x128xf32>
    %cst_19 = arith.constant dense<0.000000e+00> : vector<16x128xf32>
    %25 = tpu.matmul %9, %24, %cst_19 {dimension_numbers = #tpu.dot_dimension_numbers<[1], [0], [0], [1], [0, 0, 1, 1], [], []>} : vector<16x128xf32>, vector<128x128xf32>, vector<16x128xf32> -> vector<16x128xf32>
    %26 = arith.addf %22, %25 : vector<16x128xf32>
    %27 = vector.broadcast %10 : vector<1x128xf32> to vector<16x128xf32>
    %28 = arith.addf %26, %27 : vector<16x128xf32>
    %c0_20 = arith.constant 0 : index
    %c0_21 = arith.constant 0 : index
    %c0_22 = arith.constant 0 : index
    %29 = vector.load %arg6[%c0_20, %c0_21, %c0_22] : memref<1x16x256xf32, #tpu.memory_space<vmem>>, vector<1x16x128xf32>
    %30 = vector.shape_cast %29 : vector<1x16x128xf32> to vector<16x128xf32>
    %31 = vector.shape_cast %19 : vector<16x128xf32> to vector<1x16x128xf32>
    tpu.vector_store %arg6[%c0_20, %c0_21, %c0_22], %31 {strides = array<i32>} : memref<1x16x256xf32, #tpu.memory_space<vmem>>, vector<1x16x128xf32>,
    %c0_23 = arith.constant 0 : index
    %c0_24 = arith.constant 0 : index
    %c128 = arith.constant 128 : index
    %32 = vector.load %arg6[%c0_23, %c0_24, %c128] : memref<1x16x256xf32, #tpu.memory_space<vmem>>, vector<1x16x128xf32>
    %33 = vector.shape_cast %32 : vector<1x16x128xf32> to vector<16x128xf32>
    %34 = vector.shape_cast %28 : vector<16x128xf32> to vector<1x16x128xf32>
    tpu.vector_store %arg6[%c0_23, %c0_24, %c128], %34 {strides = array<i32>} : memref<1x16x256xf32, #tpu.memory_space<vmem>>, vector<1x16x128xf32>,
    return
  }
  func.func @transform_0(%arg0: i32, %arg1: i32) -> (i32, i32, i32) {
    %c0_i32 = arith.constant 0 : i32
    %c0_i32_0 = arith.constant 0 : i32
    return %arg0, %arg1, %c0_i32 : i32, i32, i32
  }
  func.func @transform_1(%arg0: i32, %arg1: i32) -> (i32, i32, i32, i32) {
    %c0_i32 = arith.constant 0 : i32
    %c0_i32_0 = arith.constant 0 : i32
    %c0_i32_1 = arith.constant 0 : i32
    return %arg0, %arg1, %c0_i32, %c0_i32_0 : i32, i32, i32, i32
  }
  func.func @transform_2(%arg0: i32, %arg1: i32) -> (i32, i32, i32) {
    %c0_i32 = arith.constant 0 : i32
    %c0_i32_0 = arith.constant 0 : i32
    %c0_i32_1 = arith.constant 0 : i32
    %c0_i32_2 = arith.constant 0 : i32
    return %c0_i32, %c0_i32_0, %c0_i32_1 : i32, i32, i32
  }
  func.func @transform_3(%arg0: i32, %arg1: i32) -> (i32, i32) {
    %c0_i32 = arith.constant 0 : i32
    %c0_i32_0 = arith.constant 0 : i32
    %c0_i32_1 = arith.constant 0 : i32
    return %c0_i32, %c0_i32_0 : i32, i32
  }
  func.func @transform_4(%arg0: i32, %arg1: i32) -> (i32, i32, i32) {
    %c0_i32 = arith.constant 0 : i32
    %c0_i32_0 = arith.constant 0 : i32
    return %arg0, %arg1, %c0_i32 : i32, i32, i32
  }
}

</mosaic_0001>

<llo_original>
// kernel: upsample1d.1
$region0: #{upsample1d.1}
  #allocation0 [shape = 'u32[]', space=smem, size = 0x4, offset = 0x4, fixed_abs, tag = 'smem constant byte address 0x4 - core index']
  #allocation1 [shape = 'u32[144,128]{1,0:T(1,128)}', space=vmem, size = 0x12000, scoped, tag = 'internal scratch']
  %s0 = inlined_call_operand.vmem [shape: f32[2,16,128], index: 0, kind: input, shape index: {}]
  %s1 = inlined_call_operand.vmem [shape: f32[2,1,2,128], index: 1, kind: input, shape index: {}]
  %s2 = inlined_call_operand.vmem [shape: f32[4,128,128], index: 2, kind: input, shape index: {}]
  %s3 = inlined_call_operand.vmem [shape: f32[1,128], index: 3, kind: input, shape index: {}]
  %s4 = inlined_call_operand.vmem [shape: f32[2,16,256], index: 4, kind: output, shape index: {}]
  %s5 = sld [smem:[#allocation0]]
  $region49: #{upsample1d.1} parent=0
    _
  %s7 = ssub.s32 1, %s5
  %s8 = scalar_select 0, %s7, %s5
  loop: start=0, step=1, limit=4
  $region2: #{upsample1d.1} parent=0 // loop_pre_header
    _
  $region3: #{upsample1d.1} parent=0 // loop_header
    %s10 = sphi 0, %s14
    %p11 = scmp.ge.s32.totalorder %s10, 4
    %s17 = sphi 0, %s29
    %s18 = sphi 0, %s25
    %s19 = sphi 0, %s17
    %s20 = sphi 0, %s18
    %s21 = sphi 0, %s19
    %s22 = sphi 0, %s20
    %s34 = sphi 0, %s36
    %s37 = sphi 0, %s34
    %s38 = sphi 0, %s37
    %s54 = sphi 0, %s38
    %s62 = sphi 0, %s64
    %s65 = sphi 0, %s62
    %s66 = sphi 0, %s65
    %s82 = sphi 0, %s66
    %s86 = sphi 0, %s86
    %s88 = sphi 0, %s86
    %s89 = sphi 0, %s88
    %s103 = sphi 0, %s89
    %s107 = sphi 0, %s107
    %s109 = sphi 0, %s107
    %s110 = sphi 0, %s109
    %s124 = sphi 0, %s110
    %s132 = sphi 0, %s134
    %s135 = sphi 0, %s132
    %s136 = sphi 0, %s135
    %s152 = sphi 0, %s136
  $region4: #{upsample1d.1} parent=0 // loop_header_branch
    %13 = sbr.rel (%p11) target = $region8
  $region5: #{upsample1d.1} parent=0 // loop_body
    %s15 = ssub.s32 %s10, 1
    %s16 = ssub.s32 %s10, 2
    %s23 = sadd.s32 1, %s18
    %p24 = scmp.ge.s32.totalorder %s23, 1
    %s25 = scalar_select %p24, 0, %s23
    %s26 = sadd.s32 1, %s17
    %s27 = scalar_select %p24, %s26, %s17
    %p28 = scmp.ge.s32.totalorder %s27, 2
    %s29 = scalar_select %p28, 0, %s27
    %s30 = ssub.s32 %s17, %s29
    %s31 = ssub.s32 %s18, %s25
    %s32 = sor.u32 %s30, %s31
    %p33 = scmp.eq.s32.totalorder %s32, 0
    %s35 = sadd.s32 %s34, 1
    %s36 = scalar_select %p33, %s34, %s35
    %p39 = pneg %p33
    %p40 = scmp.eq.s32.totalorder %s10, 1
    %p41 = por %p39, %p40
    %p42 = scmp.ne.s32.totalorder %s34, %s37
    %p43 = scmp.eq.s32.totalorder %s10, 0
    %p44 = por %p42, %p43
    %p45 = scmp.ne.s32.totalorder %s34, %s37
    %p46 = scmp.eq.s32.totalorder %s15, 1
    %p47 = por %p45, %p46
    %p48 = scmp.ne.s32.totalorder %s37, %s38
    %p49 = scmp.eq.s32.totalorder %s15, 0
    %p50 = por %p48, %p49
    %p51 = scmp.ne.s32.totalorder %s37, %s38
    %p52 = scmp.eq.s32.totalorder %s16, 1
    %p53 = por %p51, %p52
    %p55 = scmp.ne.s32.totalorder %s38, %s54
    %p56 = scmp.eq.s32.totalorder %s16, 0
    %p57 = por %p55, %p56
    %s58 = ssub.s32 %s17, %s29
    %s59 = ssub.s32 %s18, %s25
    %s60 = sor.u32 %s58, %s59
    %p61 = scmp.eq.s32.totalorder %s60, 0
    %s63 = sadd.s32 %s62, 1
    %s64 = scalar_select %p61, %s62, %s63
    %p67 = pneg %p61
    %p68 = scmp.eq.s32.totalorder %s10, 1
    %p69 = por %p67, %p68
    %p70 = scmp.ne.s32.totalorder %s62, %s65
    %p71 = scmp.eq.s32.totalorder %s10, 0
    %p72 = por %p70, %p71
    %p73 = scmp.ne.s32.totalorder %s62, %s65
    %p74 = scmp.eq.s32.totalorder %s15, 1
    %p75 = por %p73, %p74
    %p76 = scmp.ne.s32.totalorder %s65, %s66
    %p77 = scmp.eq.s32.totalorder %s15, 0
    %p78 = por %p76, %p77
    %p79 = scmp.ne.s32.totalorder %s65, %s66
    %p80 = scmp.eq.s32.totalorder %s16, 1
    %p81 = por %p79, %p80
    %p83 = scmp.ne.s32.totalorder %s66, %s82
    %p84 = scmp.eq.s32.totalorder %s16, 0
    %p85 = por %p83, %p84
    %s87 = sadd.s32 %s86, 1
    %p90 = scmp.eq.s32.totalorder %s10, 1
    %p91 = scmp.ne.s32.totalorder %s86, %s88
    %p92 = scmp.eq.s32.totalorder %s10, 0
    %p93 = por %p91, %p92
    %p94 = scmp.ne.s32.totalorder %s86, %s88
    %p95 = scmp.eq.s32.totalorder %s15, 1
    %p96 = por %p94, %p95
    %p97 = scmp.ne.s32.totalorder %s88, %s89
    %p98 = scmp.eq.s32.totalorder %s15, 0
    %p99 = por %p97, %p98
    %p100 = scmp.ne.s32.totalorder %s88, %s89
    %p101 = scmp.eq.s32.totalorder %s16, 1
    %p102 = por %p100, %p101
    %p104 = scmp.ne.s32.totalorder %s89, %s103
    %p105 = scmp.eq.s32.totalorder %s16, 0
    %p106 = por %p104, %p105
    %s108 = sadd.s32 %s107, 1
    %p111 = scmp.eq.s32.totalorder %s10, 1
    %p112 = scmp.ne.s32.totalorder %s107, %s109
    %p113 = scmp.eq.s32.totalorder %s10, 0
    %p114 = por %p112, %p113
    %p115 = scmp.ne.s32.totalorder %s107, %s109
    %p116 = scmp.eq.s32.totalorder %s15, 1
    %p117 = por %p115, %p116
    %p118 = scmp.ne.s32.totalorder %s109, %s110
    %p119 = scmp.eq.s32.totalorder %s15, 0
    %p120 = por %p118, %p119
    %p121 = scmp.ne.s32.totalorder %s109, %s110
    %p122 = scmp.eq.s32.totalorder %s16, 1
    %p123 = por %p121, %p122
    %p125 = scmp.ne.s32.totalorder %s110, %s124
    %p126 = scmp.eq.s32.totalorder %s16, 0
    %p127 = por %p125, %p126
    %s128 = ssub.s32 %s17, %s29
    %s129 = ssub.s32 %s18, %s25
    %s130 = sor.u32 %s128, %s129
    %p131 = scmp.eq.s32.totalorder %s130, 0
    %s133 = sadd.s32 %s132, 1
    %s134 = scalar_select %p131, %s132, %s133
    %p137 = pneg %p131
    %p138 = scmp.eq.s32.totalorder %s10, 1
    %p139 = por %p137, %p138
    %p140 = scmp.ne.s32.totalorder %s132, %s135
    %p141 = scmp.eq.s32.totalorder %s10, 0
    %p142 = por %p140, %p141
    %p143 = scmp.ne.s32.totalorder %s132, %s135
    %p144 = scmp.eq.s32.totalorder %s15, 1
    %p145 = por %p143, %p144
    %p146 = scmp.ne.s32.totalorder %s135, %s136
    %p147 = scmp.eq.s32.totalorder %s15, 0
    %p148 = por %p146, %p147
    %p149 = scmp.ne.s32.totalorder %s135, %s136
    %p150 = scmp.eq.s32.totalorder %s16, 1
    %p151 = por %p149, %p150
    %p153 = scmp.ne.s32.totalorder %s136, %s152
    %p154 = scmp.eq.s32.totalorder %s16, 0
    %p155 = por %p153, %p154
    %p156 = scmp.le.s32.totalorder 1, %s10
    %p157 = scmp.lt.s32.totalorder %s10, 3
    %p158 = pnand %p156, %p157
    %p159 = pneg %p158
    // Predicated region
    $region9: #{upsample1d.1} parent=5 // pred_check
      _
    $region10: #{upsample1d.1} parent=5 // pred_check_branch
      %161 = sbr.rel (%p158) target = $region12
    $region11: #{upsample1d.1} parent=5 // pred_region
      %s162 = ssub.s32 %s10, 1
      // Predicated region
      $region13: #{upsample1d.1} parent=11 // pred_check
        %p163 = pneg %p99
      $region14: #{upsample1d.1} parent=11 // pred_check_branch
        %165 = sbr.rel (%p163) target = $region16
      $region15: #{upsample1d.1} parent=11 // pred_region
        _
      $region16: #{upsample1d.1} parent=11 // pred_fallthru
        _
      // Predicated region
      $region17: #{upsample1d.1} parent=11 // pred_check
        %p166 = pneg %p120
      $region18: #{upsample1d.1} parent=11 // pred_check_branch
        %168 = sbr.rel (%p166) target = $region20
      $region19: #{upsample1d.1} parent=11 // pred_region
        _
      $region20: #{upsample1d.1} parent=11 // pred_fallthru
        _
    $region12: #{upsample1d.1} parent=5 // pred_fallthru
      _
    %p169 = scmp.lt.s32.totalorder %s10, 2
    // Predicated region
    $region21: #{upsample1d.1} parent=5 // pred_check
      %p170 = pneg %p169
    $region22: #{upsample1d.1} parent=5 // pred_check_branch
      %172 = sbr.rel (%p170) target = $region24
    $region23: #{upsample1d.1} parent=5 // pred_region
      // Predicated region
      $region25: #{upsample1d.1} parent=23 // pred_check
        %p173 = pneg %p44
      $region26: #{upsample1d.1} parent=23 // pred_check_branch
        %175 = sbr.rel (%p173) target = $region28
      $region27: #{upsample1d.1} parent=23 // pred_region
        %s176 = smul.u32 2, %s18
        %p177 = scmp.lt.s32.totalorder %s17, 1
        %s178 = scalar_select %p177, %s17, 1
        %p179 = scmp.lt.s32.totalorder %s176, 1
        %s180 = scalar_select %p179, %s176, 1
        %s181 = smul.addr %s178, 2
        %s182 = sadd.s32 %s180, %s181
        %s183 = smul.addr %s182, 8
        %s184 = scalar_lea.vmem %s0, %s183
        %s185 = smul.u32 2, %s18
      $region28: #{upsample1d.1} parent=23 // pred_fallthru
        _
      // Predicated region
      $region29: #{upsample1d.1} parent=23 // pred_check
        %p186 = pneg %p72
      $region30: #{upsample1d.1} parent=23 // pred_check_branch
        %188 = sbr.rel (%p186) target = $region32
      $region31: #{upsample1d.1} parent=23 // pred_region
        %p189 = scmp.lt.s32.totalorder %s17, 1
        %s190 = scalar_select %p189, %s17, 1
        %p191 = scmp.lt.s32.totalorder %s18, 0
        %s192 = scalar_select %p191, %s18, 0
        %s193 = sadd.s32 %s192, %s190
        %s194 = smul.addr %s193, 2
        %s195 = scalar_lea.vmem %s1, %s194
      $region32: #{upsample1d.1} parent=23 // pred_fallthru
        _
    $region24: #{upsample1d.1} parent=5 // pred_fallthru
      _
    %p196 = scmp.le.s32.totalorder 1, %s10
    %p197 = scmp.lt.s32.totalorder %s10, 3
    %p198 = pnand %p196, %p197
    %p199 = pneg %p198
    // Predicated region
    $region33: #{upsample1d.1} parent=5 // pred_check
      _
    $region34: #{upsample1d.1} parent=5 // pred_check_branch
      %201 = sbr.rel (%p198) target = $region36
    $region35: #{upsample1d.1} parent=5 // pred_region
      %s202 = ssub.s32 %s10, 1
      %s203 = smul.u32 2, %s20
      %p204 = scmp.lt.s32.totalorder %s19, 1
      %s205 = scalar_select %p204, %s19, 1
      %p206 = scmp.lt.s32.totalorder %s203, 1
      %s207 = scalar_select %p206, %s203, 1
      %s208 = smul.addr %s205, 2
      %s209 = sadd.s32 %s207, %s208
      %s210 = smul.addr %s209, 8
      %s211 = scalar_lea.vmem %s0, %s210
      %p212 = pneg %p50
      %p213 = pneg %p47
      %p214 = scmp.lt.s32.totalorder %s19, 1
      %s215 = scalar_select %p214, %s19, 1
      %p216 = scmp.lt.s32.totalorder %s20, 0
      %s217 = scalar_select %p216, %s20, 0
      %s218 = sadd.s32 %s217, %s215
      %s219 = smul.addr %s218, 2
      %s220 = scalar_lea.vmem %s1, %s219
      %p221 = pneg %p78
      %p222 = pneg %p75
      %p223 = pneg %p99
      %p224 = pneg %p96
      %p225 = pneg %p120
      %p226 = pneg %p117
      %p227 = pneg %p148
      %p228 = pneg %p145
      %s229 = smul.u32 2, %s20
      %p230 = scmp.lt.s32.totalorder %s19, 1
      %s231 = scalar_select %p230, %s19, 1
      %p232 = scmp.lt.s32.totalorder %s229, 1
      %s233 = scalar_select %p232, %s229, 1
      %s234 = smul.addr %s233, 2
      %s235 = smul.addr %s231, 4
      %s236 = sadd.s32 %s234, %s235
      %s237 = smul.addr %s236, 8
      %s238 = scalar_lea.vmem %s4, %s237
      %s239 = smul.u32 2, %s20
      %p240 = scmp.lt.s32.totalorder %s19, 1
      %s241 = scalar_select %p240, %s19, 1
      %p242 = scmp.lt.s32.totalorder %s239, 1
      %s243 = scalar_select %p242, %s239, 1
      %s244 = smul.addr %s241, 2
      %s245 = sadd.s32 %s243, %s244
      %s246 = smul.addr %s245, 8
      %s247 = scalar_lea.vmem %s0, %s246
      %s248 = smul.u32 2, %s20
      %p249 = scmp.lt.s32.totalorder %s19, 1
      %s250 = scalar_select %p249, %s19, 1
      %p251 = scmp.lt.s32.totalorder %s20, 0
      %s252 = scalar_select %p251, %s20, 0
      %s253 = sadd.s32 %s252, %s250
      %s254 = smul.addr %s253, 2
      %s255 = scalar_lea.vmem %s1, %s254
      %s256 = smul.u32 2, %s20
      %p257 = scmp.lt.s32.totalorder %s19, 1
      %s258 = scalar_select %p257, %s19, 1
      %p259 = scmp.lt.s32.totalorder %s256, 1
      %s260 = scalar_select %p259, %s256, 1
      %s261 = smul.addr %s260, 2
      %s262 = smul.addr %s258, 4
      %s263 = sadd.s32 %s261, %s262
      %s264 = smul.addr %s263, 8
      %s265 = scalar_lea.vmem %s4, %s264
      %s266 = smul.u32 2, %s20
      %v267 = vld [vmem:[%s247] sm:$0xff]
      %v268 = vld [vmem:[%s247 + $0x8] sm:$0xff]
      %v269 = vld [vmem:[%s255] sm:$0x3]
      %vm272 = vcmask 1040384
      %v273 = vrot.slane %v267, 7
      %v274 = vrot.slane %v268, 7
      %v275 = vsel %vm272, %v273, %v274
      %v278 = vsel %vm272, %v269, %v273
      %vm279 = vcmask 1046528
      %v280 = vrot.slane %v267, 1
      %v281 = vrot.slane %v268, 1
      %v282 = vsel %vm279, %v280, %v281
      %v286 = vrot.slane %v269, 2
      %v288 = vsel %vm279, %v281, %v286
      %v289 = vld [vmem:[%s3] sm:$0x1]
      %s290 = scalar_lea.vmem %s2, 128
      %v291 = vld [vmem:[%s290] sm:$0xff]
      %v292 = vld [vmem:[%s290 + $0x8] sm:$0xff]
      %v293 = vld [vmem:[%s290 + $0x10] sm:$0xff]
      %v294 = vld [vmem:[%s290 + $0x18] sm:$0xff]
      %v295 = vld [vmem:[%s290 + $0x20] sm:$0xff]
      %v296 = vld [vmem:[%s290 + $0x28] sm:$0xff]
      %v297 = vld [vmem:[%s290 + $0x30] sm:$0xff]
      %v298 = vld [vmem:[%s290 + $0x38] sm:$0xff]
      %v299 = vld [vmem:[%s290 + $0x40] sm:$0xff]
      %v300 = vld [vmem:[%s290 + $0x48] sm:$0xff]
      %v301 = vld [vmem:[%s290 + $0x50] sm:$0xff]
      %v302 = vld [vmem:[%s290 + $0x58] sm:$0xff]
      %v303 = vld [vmem:[%s290 + $0x60] sm:$0xff]
      %v304 = vld [vmem:[%s290 + $0x68] sm:$0xff]
      %v305 = vld [vmem:[%s290 + $0x70] sm:$0xff]
      %v306 = vld [vmem:[%s290 + $0x78] sm:$0xff]
      %s307 = scalar_lea.vmem %s2, 384
      %v308 = vld [vmem:[%s307] sm:$0xff]
      %v309 = vld [vmem:[%s307 + $0x8] sm:$0xff]
      %v310 = vld [vmem:[%s307 + $0x10] sm:$0xff]
      %v311 = vld [vmem:[%s307 + $0x18] sm:$0xff]
      %v312 = vld [vmem:[%s307 + $0x20] sm:$0xff]
      %v313 = vld [vmem:[%s307 + $0x28] sm:$0xff]
      %v314 = vld [vmem:[%s307 + $0x30] sm:$0xff]
      %v315 = vld [vmem:[%s307 + $0x38] sm:$0xff]
      %v316 = vld [vmem:[%s307 + $0x40] sm:$0xff]
      %v317 = vld [vmem:[%s307 + $0x48] sm:$0xff]
      %v318 = vld [vmem:[%s307 + $0x50] sm:$0xff]
      %v319 = vld [vmem:[%s307 + $0x58] sm:$0xff]
      %v320 = vld [vmem:[%s307 + $0x60] sm:$0xff]
      %v321 = vld [vmem:[%s307 + $0x68] sm:$0xff]
      %v322 = vld [vmem:[%s307 + $0x70] sm:$0xff]
      %v323 = vld [vmem:[%s307 + $0x78] sm:$0xff]
      %324 = vmatprep.subr.mxu0 0.0
      %325 = vmatpush1.msra.mxu0 %v323
      %326 = vmatprep.subr.mxu0 0.0
      %327 = vmatpush1.msra.mxu0 %v322
      %328 = vmatprep.subr.mxu0 0.0
      %329 = vmatpush1.msra.mxu0 %v321
      %330 = vmatprep.subr.mxu0 0.0
      %331 = vmatpush1.msra.mxu0 %v320
      %332 = vmatprep.subr.mxu0 0.0
      %333 = vmatpush1.msra.mxu0 %v319
      %334 = vmatprep.subr.mxu0 0.0
      %335 = vmatpush1.msra.mxu0 %v318
      %336 = vmatprep.subr.mxu0 0.0
      %337 = vmatpush1.msra.mxu0 %v317
      %338 = vmatprep.subr.mxu0 0.0
      %339 = vmatpush1.msra.mxu0 %v316
      %340 = vmatprep.subr.mxu0 0.0
      %341 = vmatpush1.msra.mxu0 %v315
      %342 = vmatprep.subr.mxu0 0.0
      %343 = vmatpush1.msra.mxu0 %v314
      %344 = vmatprep.subr.mxu0 0.0
      %345 = vmatpush1.msra.mxu0 %v313
      %346 = vmatprep.subr.mxu0 0.0
      %347 = vmatpush1.msra.mxu0 %v312
      %348 = vmatprep.subr.mxu0 0.0
      %349 = vmatpush1.msra.mxu0 %v311
      %350 = vmatprep.subr.mxu0 0.0
      %351 = vmatpush1.msra.mxu0 %v310
      %352 = vmatprep.subr.mxu0 0.0
      %353 = vmatpush1.msra.mxu0 %v309
      %354 = vmatprep.subr.mxu0 0.0
      %355 = vmatpush1.msra.mxu0 %v308
      %356 = vmatprep.subr.mxu0 0.0
      %357 = vmatpush2.msra.mxu0 0.0
      %358 = vmatprep.subr.mxu0 0.0
      %359 = vmatpush2.msra.mxu0 0.0
      %360 = vmatprep.subr.mxu0 0.0
      %361 = vmatpush2.msra.mxu0 0.0
      %362 = vmatprep.subr.mxu0 0.0
      %363 = vmatpush2.msra.mxu0 0.0
      %364 = vmatprep.subr.mxu0 0.0
      %365 = vmatpush2.msra.mxu0 0.0
      %366 = vmatprep.subr.mxu0 0.0
      %367 = vmatpush2.msra.mxu0 0.0
      %368 = vmatprep.subr.mxu0 0.0
      %369 = vmatpush2.msra.mxu0 0.0
      %370 = vmatprep.subr.mxu0 0.0
      %371 = vmatpush2.msra.mxu0 0.0
      %372 = vmatprep.subr.mxu0 0.0
      %373 = vmatpush2.msra.mxu0 0.0
      %374 = vmatprep.subr.mxu0 0.0
      %375 = vmatpush2.msra.mxu0 0.0
      %376 = vmatprep.subr.mxu0 0.0
      %377 = vmatpush2.msra.mxu0 0.0
      %378 = vmatprep.subr.mxu0 0.0
      %379 = vmatpush2.msra.mxu0 0.0
      %380 = vmatprep.subr.mxu0 0.0
      %381 = vmatpush2.msra.mxu0 0.0
      %382 = vmatprep.subr.mxu0 0.0
      %383 = vmatpush2.msra.mxu0 0.0
      %384 = vmatprep.subr.mxu0 0.0
      %385 = vmatpush2.msra.mxu0 0.0
      %386 = vmatprep.subr.mxu0 0.0
      %387 = vmatpush2.msra.mxu0 0.0
      %388 = vmatprep.mubr.f32.mxu0 0.0
      %389 = vmatmul.mubr.f32.gmra.mxu0 %v278
      %v390 = vpop.f32.mrf.mxu0
      %v391 = vadd.f32 0.0, %v390
      %v392 = vpop.f32.mrf.mxu0
      %393 = vmatprep.mubr.f32.mxu0 0.0
      %394 = vmatmul.mubr.f32.gmra.mxu0 %v275
      %v395 = vpop.f32.mrf.mxu0
      %v396 = vadd.f32 0.0, %v395
      %v397 = vpop.f32.mrf.mxu0
      %398 = vdwg.mxu0
      %399 = vmatprep.subr.mxu0 0.0
      %400 = vmatpush1.msra.mxu0 %v306
      %401 = vmatprep.subr.mxu0 0.0
      %402 = vmatpush1.msra.mxu0 %v305
      %403 = vmatprep.subr.mxu0 0.0
      %404 = vmatpush1.msra.mxu0 %v304
      %405 = vmatprep.subr.mxu0 0.0
      %406 = vmatpush1.msra.mxu0 %v303
      %407 = vmatprep.subr.mxu0 0.0
      %408 = vmatpush1.msra.mxu0 %v302
      %409 = vmatprep.subr.mxu0 0.0
      %410 = vmatpush1.msra.mxu0 %v301
      %411 = vmatprep.subr.mxu0 0.0
      %412 = vmatpush1.msra.mxu0 %v300
      %413 = vmatprep.subr.mxu0 0.0
      %414 = vmatpush1.msra.mxu0 %v299
      %415 = vmatprep.subr.mxu0 0.0
      %416 = vmatpush1.msra.mxu0 %v298
      %417 = vmatprep.subr.mxu0 0.0
      %418 = vmatpush1.msra.mxu0 %v297
      %419 = vmatprep.subr.mxu0 0.0
      %420 = vmatpush1.msra.mxu0 %v296
      %421 = vmatprep.subr.mxu0 0.0
      %422 = vmatpush1.msra.mxu0 %v295
      %423 = vmatprep.subr.mxu0 0.0
      %424 = vmatpush1.msra.mxu0 %v294
      %425 = vmatprep.subr.mxu0 0.0
      %426 = vmatpush1.msra.mxu0 %v293
      %427 = vmatprep.subr.mxu0 0.0
      %428 = vmatpush1.msra.mxu0 %v292
      %429 = vmatprep.subr.mxu0 0.0
      %430 = vmatpush1.msra.mxu0 %v291
      %431 = vmatprep.subr.mxu0 0.0
      %432 = vmatpush2.msra.mxu0 0.0
      %433 = vmatprep.subr.mxu0 0.0
      %434 = vmatpush2.msra.mxu0 0.0
      %435 = vmatprep.subr.mxu0 0.0
      %436 = vmatpush2.msra.mxu0 0.0
      %437 = vmatprep.subr.mxu0 0.0
      %438 = vmatpush2.msra.mxu0 0.0
      %439 = vmatprep.subr.mxu0 0.0
      %440 = vmatpush2.msra.mxu0 0.0
      %441 = vmatprep.subr.mxu0 0.0
      %442 = vmatpush2.msra.mxu0 0.0
      %443 = vmatprep.subr.mxu0 0.0
      %444 = vmatpush2.msra.mxu0 0.0
      %445 = vmatprep.subr.mxu0 0.0
      %446 = vmatpush2.msra.mxu0 0.0
      %447 = vmatprep.subr.mxu0 0.0
      %448 = vmatpush2.msra.mxu0 0.0
      %449 = vmatprep.subr.mxu0 0.0
      %450 = vmatpush2.msra.mxu0 0.0
      %451 = vmatprep.subr.mxu0 0.0
      %452 = vmatpush2.msra.mxu0 0.0
      %453 = vmatprep.subr.mxu0 0.0
      %454 = vmatpush2.msra.mxu0 0.0
      %455 = vmatprep.subr.mxu0 0.0
      %456 = vmatpush2.msra.mxu0 0.0
      %457 = vmatprep.subr.mxu0 0.0
      %458 = vmatpush2.msra.mxu0 0.0
      %459 = vmatprep.subr.mxu0 0.0
      %460 = vmatpush2.msra.mxu0 0.0
      %461 = vmatprep.subr.mxu0 0.0
      %462 = vmatpush2.msra.mxu0 0.0
      %463 = vmatprep.mubr.f32.mxu0 0.0
      %464 = vmatmul.mubr.f32.gmra.mxu0 %v267
      %v465 = vpop.f32.mrf.mxu0
      %v466 = vadd.f32 %v391, %v465
      %v467 = vpop.f32.mrf.mxu0
      %468 = vmatprep.mubr.f32.mxu0 0.0
      %469 = vmatmul.mubr.f32.gmra.mxu0 %v268
      %v470 = vpop.f32.mrf.mxu0
      %v471 = vadd.f32 %v396, %v470
      %v472 = vpop.f32.mrf.mxu0
      %473 = vdwg.mxu0
      %v475 = vlaneseq
      %v476 = vshrl.u32 %v475, 7
      %v477 = vsub.s32 0, %v476
      %v478 = vrot.slane %v289, %v477
      %v480 = vadd.f32 %v466, %v478
      %v481 = vadd.f32 %v471, %v478
      %s482 = scalar_lea.vmem %s2, 256
      %v483 = vld [vmem:[%s482] sm:$0xff]
      %v484 = vld [vmem:[%s482 + $0x8] sm:$0xff]
      %v485 = vld [vmem:[%s482 + $0x10] sm:$0xff]
      %v486 = vld [vmem:[%s482 + $0x18] sm:$0xff]
      %v487 = vld [vmem:[%s482 + $0x20] sm:$0xff]
      %v488 = vld [vmem:[%s482 + $0x28] sm:$0xff]
      %v489 = vld [vmem:[%s482 + $0x30] sm:$0xff]
      %v490 = vld [vmem:[%s482 + $0x38] sm:$0xff]
      %v491 = vld [vmem:[%s482 + $0x40] sm:$0xff]
      %v492 = vld [vmem:[%s482 + $0x48] sm:$0xff]
      %v493 = vld [vmem:[%s482 + $0x50] sm:$0xff]
      %v494 = vld [vmem:[%s482 + $0x58] sm:$0xff]
      %v495 = vld [vmem:[%s482 + $0x60] sm:$0xff]
      %v496 = vld [vmem:[%s482 + $0x68] sm:$0xff]
      %v497 = vld [vmem:[%s482 + $0x70] sm:$0xff]
      %v498 = vld [vmem:[%s482 + $0x78] sm:$0xff]
      %v499 = vld [vmem:[%s2] sm:$0xff]
      %v500 = vld [vmem:[%s2 + $0x8] sm:$0xff]
      %v501 = vld [vmem:[%s2 + $0x10] sm:$0xff]
      %v502 = vld [vmem:[%s2 + $0x18] sm:$0xff]
      %v503 = vld [vmem:[%s2 + $0x20] sm:$0xff]
      %v504 = vld [vmem:[%s2 + $0x28] sm:$0xff]
      %v505 = vld [vmem:[%s2 + $0x30] sm:$0xff]
      %v506 = vld [vmem:[%s2 + $0x38] sm:$0xff]
      %v507 = vld [vmem:[%s2 + $0x40] sm:$0xff]
      %v508 = vld [vmem:[%s2 + $0x48] sm:$0xff]
      %v509 = vld [vmem:[%s2 + $0x50] sm:$0xff]
      %v510 = vld [vmem:[%s2 + $0x58] sm:$0xff]
      %v511 = vld [vmem:[%s2 + $0x60] sm:$0xff]
      %v512 = vld [vmem:[%s2 + $0x68] sm:$0xff]
      %v513 = vld [vmem:[%s2 + $0x70] sm:$0xff]
      %v514 = vld [vmem:[%s2 + $0x78] sm:$0xff]
      %515 = vmatprep.subr.mxu0 0.0
      %516 = vmatpush1.msra.mxu0 %v514
      %517 = vmatprep.subr.mxu0 0.0
      %518 = vmatpush1.msra.mxu0 %v513
      %519 = vmatprep.subr.mxu0 0.0
      %520 = vmatpush1.msra.mxu0 %v512
      %521 = vmatprep.subr.mxu0 0.0
      %522 = vmatpush1.msra.mxu0 %v511
      %523 = vmatprep.subr.mxu0 0.0
      %524 = vmatpush1.msra.mxu0 %v510
      %525 = vmatprep.subr.mxu0 0.0
      %526 = vmatpush1.msra.mxu0 %v509
      %527 = vmatprep.subr.mxu0 0.0
      %528 = vmatpush1.msra.mxu0 %v508
      %529 = vmatprep.subr.mxu0 0.0
      %530 = vmatpush1.msra.mxu0 %v507
      %531 = vmatprep.subr.mxu0 0.0
      %532 = vmatpush1.msra.mxu0 %v506
      %533 = vmatprep.subr.mxu0 0.0
      %534 = vmatpush1.msra.mxu0 %v505
      %535 = vmatprep.subr.mxu0 0.0
      %536 = vmatpush1.msra.mxu0 %v504
      %537 = vmatprep.subr.mxu0 0.0
      %538 = vmatpush1.msra.mxu0 %v503
      %539 = vmatprep.subr.mxu0 0.0
      %540 = vmatpush1.msra.mxu0 %v502
      %541 = vmatprep.subr.mxu0 0.0
      %542 = vmatpush1.msra.mxu0 %v501
      %543 = vmatprep.subr.mxu0 0.0
      %544 = vmatpush1.msra.mxu0 %v500
      %545 = vmatprep.subr.mxu0 0.0
      %546 = vmatpush1.msra.mxu0 %v499
      %547 = vmatprep.subr.mxu0 0.0
      %548 = vmatpush2.msra.mxu0 0.0
      %549 = vmatprep.subr.mxu0 0.0
      %550 = vmatpush2.msra.mxu0 0.0
      %551 = vmatprep.subr.mxu0 0.0
      %552 = vmatpush2.msra.mxu0 0.0
      %553 = vmatprep.subr.mxu0 0.0
      %554 = vmatpush2.msra.mxu0 0.0
      %555 = vmatprep.subr.mxu0 0.0
      %556 = vmatpush2.msra.mxu0 0.0
      %557 = vmatprep.subr.mxu0 0.0
      %558 = vmatpush2.msra.mxu0 0.0
      %559 = vmatprep.subr.mxu0 0.0
      %560 = vmatpush2.msra.mxu0 0.0
      %561 = vmatprep.subr.mxu0 0.0
      %562 = vmatpush2.msra.mxu0 0.0
      %563 = vmatprep.subr.mxu0 0.0
      %564 = vmatpush2.msra.mxu0 0.0
      %565 = vmatprep.subr.mxu0 0.0
      %566 = vmatpush2.msra.mxu0 0.0
      %567 = vmatprep.subr.mxu0 0.0
      %568 = vmatpush2.msra.mxu0 0.0
      %569 = vmatprep.subr.mxu0 0.0
      %570 = vmatpush2.msra.mxu0 0.0
      %571 = vmatprep.subr.mxu0 0.0
      %572 = vmatpush2.msra.mxu0 0.0
      %573 = vmatprep.subr.mxu0 0.0
      %574 = vmatpush2.msra.mxu0 0.0
      %575 = vmatprep.subr.mxu0 0.0
      %576 = vmatpush2.msra.mxu0 0.0
      %577 = vmatprep.subr.mxu0 0.0
      %578 = vmatpush2.msra.mxu0 0.0
      %579 = vmatprep.mubr.f32.mxu0 0.0
      %580 = vmatmul.mubr.f32.gmra.mxu0 %v282
      %v581 = vpop.f32.mrf.mxu0
      %v582 = vadd.f32 0.0, %v581
      %v583 = vpop.f32.mrf.mxu0
      %584 = vmatprep.mubr.f32.mxu0 0.0
      %585 = vmatmul.mubr.f32.gmra.mxu0 %v288
      %v586 = vpop.f32.mrf.mxu0
      %v587 = vadd.f32 0.0, %v586
      %v588 = vpop.f32.mrf.mxu0
      %589 = vdwg.mxu0
      %590 = vmatprep.subr.mxu0 0.0
      %591 = vmatpush1.msra.mxu0 %v498
      %592 = vmatprep.subr.mxu0 0.0
      %593 = vmatpush1.msra.mxu0 %v497
      %594 = vmatprep.subr.mxu0 0.0
      %595 = vmatpush1.msra.mxu0 %v496
      %596 = vmatprep.subr.mxu0 0.0
      %597 = vmatpush1.msra.mxu0 %v495
      %598 = vmatprep.subr.mxu0 0.0
      %599 = vmatpush1.msra.mxu0 %v494
      %600 = vmatprep.subr.mxu0 0.0
      %601 = vmatpush1.msra.mxu0 %v493
      %602 = vmatprep.subr.mxu0 0.0
      %603 = vmatpush1.msra.mxu0 %v492
      %604 = vmatprep.subr.mxu0 0.0
      %605 = vmatpush1.msra.mxu0 %v491
      %606 = vmatprep.subr.mxu0 0.0
      %607 = vmatpush1.msra.mxu0 %v490
      %608 = vmatprep.subr.mxu0 0.0
      %609 = vmatpush1.msra.mxu0 %v489
      %610 = vmatprep.subr.mxu0 0.0
      %611 = vmatpush1.msra.mxu0 %v488
      %612 = vmatprep.subr.mxu0 0.0
      %613 = vmatpush1.msra.mxu0 %v487
      %614 = vmatprep.subr.mxu0 0.0
      %615 = vmatpush1.msra.mxu0 %v486
      %616 = vmatprep.subr.mxu0 0.0
      %617 = vmatpush1.msra.mxu0 %v485
      %618 = vmatprep.subr.mxu0 0.0
      %619 = vmatpush1.msra.mxu0 %v484
      %620 = vmatprep.subr.mxu0 0.0
      %621 = vmatpush1.msra.mxu0 %v483
      %622 = vmatprep.subr.mxu0 0.0
      %623 = vmatpush2.msra.mxu0 0.0
      %624 = vmatprep.subr.mxu0 0.0
      %625 = vmatpush2.msra.mxu0 0.0
      %626 = vmatprep.subr.mxu0 0.0
      %627 = vmatpush2.msra.mxu0 0.0
      %628 = vmatprep.subr.mxu0 0.0
      %629 = vmatpush2.msra.mxu0 0.0
      %630 = vmatprep.subr.mxu0 0.0
      %631 = vmatpush2.msra.mxu0 0.0
      %632 = vmatprep.subr.mxu0 0.0
      %633 = vmatpush2.msra.mxu0 0.0
      %634 = vmatprep.subr.mxu0 0.0
      %635 = vmatpush2.msra.mxu0 0.0
      %636 = vmatprep.subr.mxu0 0.0
      %637 = vmatpush2.msra.mxu0 0.0
      %638 = vmatprep.subr.mxu0 0.0
      %639 = vmatpush2.msra.mxu0 0.0
      %640 = vmatprep.subr.mxu0 0.0
      %641 = vmatpush2.msra.mxu0 0.0
      %642 = vmatprep.subr.mxu0 0.0
      %643 = vmatpush2.msra.mxu0 0.0
      %644 = vmatprep.subr.mxu0 0.0
      %645 = vmatpush2.msra.mxu0 0.0
      %646 = vmatprep.subr.mxu0 0.0
      %647 = vmatpush2.msra.mxu0 0.0
      %648 = vmatprep.subr.mxu0 0.0
      %649 = vmatpush2.msra.mxu0 0.0
      %650 = vmatprep.subr.mxu0 0.0
      %651 = vmatpush2.msra.mxu0 0.0
      %652 = vmatprep.subr.mxu0 0.0
      %653 = vmatpush2.msra.mxu0 0.0
      %654 = vmatprep.mubr.f32.mxu0 0.0
      %655 = vmatmul.mubr.f32.gmra.mxu0 %v267
      %v656 = vpop.f32.mrf.mxu0
      %v657 = vadd.f32 %v582, %v656
      %v658 = vpop.f32.mrf.mxu0
      %659 = vmatprep.mubr.f32.mxu0 0.0
      %660 = vmatmul.mubr.f32.gmra.mxu0 %v268
      %v661 = vpop.f32.mrf.mxu0
      %v662 = vadd.f32 %v587, %v661
      %v663 = vpop.f32.mrf.mxu0
      %664 = vdwg.mxu0
      %v665 = vadd.f32 %v657, %v478
      %v666 = vadd.f32 %v662, %v478
      %667 = vst [vmem:[%s265] sm:$0xff] %v480
      %668 = vst [vmem:[%s265 + $0x10] sm:$0xff] %v481
      %669 = vst [vmem:[%s265 + $0x8] sm:$0xff] %v665
      %670 = vst [vmem:[%s265 + $0x18] sm:$0xff] %v666
      %s671 = smul.u32 2, %s20
      %p672 = scmp.lt.s32.totalorder %s19, 1
      %s673 = scalar_select %p672, %s19, 1
      %p674 = scmp.lt.s32.totalorder %s671, 1
      %s675 = scalar_select %p674, %s671, 1
      %s676 = smul.addr %s675, 2
      %s677 = smul.addr %s673, 4
      %s678 = sadd.s32 %s676, %s677
      %s679 = smul.addr %s678, 8
      %s680 = scalar_lea.vmem %s4, %s679
      // Predicated region
      $region37: #{upsample1d.1} parent=35 // pred_check
        %p681 = pneg %p145
      $region38: #{upsample1d.1} parent=35 // pred_check_branch
        %683 = sbr.rel (%p681) target = $region40
      $region39: #{upsample1d.1} parent=35 // pred_region
        %s684 = smul.u32 2, %s20
      $region40: #{upsample1d.1} parent=35 // pred_fallthru
        _
    $region36: #{upsample1d.1} parent=5 // pred_fallthru
      _
    %p685 = scmp.le.s32.totalorder 2, %s10
    // Predicated region
    $region41: #{upsample1d.1} parent=5 // pred_check
      %p686 = pneg %p685
    $region42: #{upsample1d.1} parent=5 // pred_check_branch
      %688 = sbr.rel (%p686) target = $region44
    $region43: #{upsample1d.1} parent=5 // pred_region
      %s689 = ssub.s32 %s10, 2
      // Predicated region
      $region45: #{upsample1d.1} parent=43 // pred_check
        %p690 = pneg %p151
      $region46: #{upsample1d.1} parent=43 // pred_check_branch
        %692 = sbr.rel (%p690) target = $region48
      $region47: #{upsample1d.1} parent=43 // pred_region
        %s693 = smul.u32 2, %s22
        %p694 = scmp.lt.s32.totalorder %s21, 1
        %s695 = scalar_select %p694, %s21, 1
        %p696 = scmp.lt.s32.totalorder %s693, 1
        %s697 = scalar_select %p696, %s693, 1
        %s698 = smul.addr %s697, 2
        %s699 = smul.addr %s695, 4
        %s700 = sadd.s32 %s698, %s699
        %s701 = smul.addr %s700, 8
        %s702 = scalar_lea.vmem %s4, %s701
      $region48: #{upsample1d.1} parent=43 // pred_fallthru
        _
    $region44: #{upsample1d.1} parent=5 // pred_fallthru
      _
  $region6: #{upsample1d.1} parent=0 // loop_footer
    %s14 = sadd.s32 1, %s10
  $region7: #{upsample1d.1} parent=0 // loop_footer_branch
    %9 = sbr.rel target = $region3
  $region8: #{upsample1d.1} parent=0 // loop_exit
    _

</llo_original>
